<compile_context>
chip_gen: v6e
topology: v6e:2x2x1
jax: 0.10.0
libtpu: 0.0.40
codegen_flags: <defaults>
</compile_context>

<pallas_src>
import functools

import jax
import jax.numpy as jnp
from jax.experimental import pallas as pl
from jax.experimental.pallas import tpu as pltpu


def coherent_kernel(e_ref, kq_ref, w_ref, zy_ref, *, d, m):
    """Column-only forward pass; batch lives on the lane axis.

    e_ref  : (m, n, TB)  E transposed so batch is the last (lane) axis
    kq_ref : (n, n)      (W_K^T @ W_Q) / D
    w_ref  : (2, n)      rows d and d+1 of (W_out @ W_V)
    zy_ref : (2, TB)     row 0 = z_q, row 1 = y_q
    """
    Et = e_ref[...]                # (m, n, TB)
    KQ = kq_ref[...]               # (n, n)
    Wr = w_ref[...]                # (2, n)

    Et_head = Et[: m - 1]          # (m-1, n, TB)  prompt columns 0..m-2 (fixed)
    e_last = Et[m - 1]             # (n, TB)       last prompt column

    def column_pass(e_last_in):
        # r = KQ @ e_last  -> (n, TB); one small matmul shared across the batch.
        r = jnp.dot(KQ, e_last_in, preferred_element_type=jnp.float32)
        # attn_col = E^T @ r, split into the fixed head columns + last column.
        attn_head = jnp.sum(Et_head * r[None, :, :], axis=1)          # (m-1, TB)
        attn_last = jnp.sum(e_last_in * r, axis=0, keepdims=True)     # (1, TB)
        # ea_col = E @ attn_col
        ea_col = (jnp.sum(Et_head * attn_head[:, None, :], axis=0)
                  + e_last_in * attn_last)                            # (n, TB)
        return ea_col

    # ---- Pass 1: intermediate response z_q ----
    ea1 = column_pass(e_last)
    z = jnp.dot(Wr[0:1], ea1, preferred_element_type=jnp.float32)     # (1, TB)

    # ---- E' update: only E[:, d, -1] <- z changes (row d of the last column) ----
    row_ids = jax.lax.broadcasted_iota(jnp.int32, e_last.shape, 0)    # (n, TB)
    e_last2 = jnp.where(row_ids == d, z, e_last)                      # (n, TB)

    # ---- Pass 2: final response y_q ----
    ea2 = column_pass(e_last2)
    y = jnp.dot(Wr[1:2], ea2, preferred_element_type=jnp.float32)     # (1, TB)

    # Single lane-dense output store (one unmasked store group, one writeback DMA).
    zy_ref[...] = jnp.concatenate([z, y], axis=0)


# Lane cap per batch block.  Keeps the double-buffered padded E block
# (m * 16 sublanes * block_b lanes * 4 B * 2 buffers ~ 5 MiB at 8192) well
# under the scoped-VMEM default on every generation, including v7x (32 MiB).
_BLOCK_CAP = 8192


def _pick_block_b(Bp):
    """Choose the batch block (in lanes). Bp must be a multiple of 128.

    Goals: (a) large blocks to amortize the ~0.35 us per-grid-step overhead
    and approach the HBM roofline, (b) at least two grid steps when Bp >= 256
    so the "parallel" batch axis can be sharded across both v7x TensorCores,
    (c) stay under _BLOCK_CAP for VMEM headroom.
    """
    if Bp <= 128:
        return Bp
    target = min(_BLOCK_CAP, Bp // 2)          # guarantee >= 2 grid blocks
    target = max(128, (target // 128) * 128)   # keep lane axis dense
    bb = target
    while Bp % bb != 0:                        # Bp % 128 == 0, so this terminates
        bb -= 128
    return bb


@functools.partial(jax.jit, static_argnames=("d", "D"))
def coherent_transformer(E_CoT, W_K, W_Q, W_V, W_out, *, d, D):
    B, n, m = E_CoT.shape

    # Fused weights (computed once, off the kernel critical path).
    KQ = (W_K.T @ W_Q) / float(D)                 # (n, n)
    Wr = (W_out @ W_V)[d:d + 2, :]                # (2, n): rows d and d+1

    # Pad batch to a multiple of 128: dense lane axis (unmasked full-vreg
    # loads/stores) and a splittable grid even for ragged B.
    Bp = ((B + 127) // 128) * 128
    if Bp != B:
        E_CoT = jnp.pad(E_CoT, ((0, Bp - B), (0, 0), (0, 0)))

    # Layout plumbing: put batch on the lane axis.  With allow_input_fusion on
    # operand 0 (and the whole wrapper jitted), XLA may fuse this transpose
    # into the pallas_call input DMA instead of materializing a second copy of
    # E in HBM.  Producers that can emit E as (m, n, B) directly avoid it
    # entirely.
    E_t = jnp.transpose(E_CoT, (2, 1, 0))         # (m, n, Bp)

    block_b = _pick_block_b(Bp)
    grid = (Bp // block_b,)

    kernel = functools.partial(coherent_kernel, d=d, m=m)

    # Advisory cost hint: this kernel is tiny (column-only, two passes).
    flops = int(2 * Bp * (2 * n * n + 4 * m * n + 2 * n))
    bytes_accessed = int(4 * (Bp * n * m + n * n + 2 * n + 2 * Bp))

    zy = pl.pallas_call(
        kernel,
        out_shape=jax.ShapeDtypeStruct((2, Bp), jnp.float32),
        grid=grid,
        in_specs=[
            pl.BlockSpec((m, n, block_b), lambda i: (0, 0, i)),
            pl.BlockSpec((n, n), lambda i: (0, 0)),
            pl.BlockSpec((2, n), lambda i: (0, 0)),
        ],
        out_specs=pl.BlockSpec((2, block_b), lambda i: (0, i)),
        compiler_params=pltpu.CompilerParams(
            dimension_semantics=("parallel",),
            # Allow XLA to fuse the E transpose (operand 0) into the input DMA.
            allow_input_fusion=[True, False, False],
        ),
        cost_estimate=pl.CostEstimate(flops=flops, transcendentals=0,
                                      bytes_accessed=bytes_accessed),
    )(E_t, KQ, Wr)

    return zy[0, :B], zy[1, :B]


def make_params(d, sigma2, key):
    """Deterministic parameter construction following initialize_parameters()."""
    n = d + 2
    v_z = ((d - 1) * sigma2 - 2.0) / ((d - 1) * sigma2 + 2.0)
    v_y = v_z + 4.0 / ((d - 1) * sigma2 + 2.0)
    v_x = v_y - v_z

    W_K = jnp.zeros((n, n), jnp.float32)
    W_K = W_K.at[:d, :d].set(jnp.eye(d, dtype=jnp.float32) * v_z)
    W_K = W_K.at[d, d].set(v_z)
    W_K = W_K.at[d + 1, d + 1].set(v_y)
    W_Q = W_K

    W_out = jnp.zeros((n, n), jnp.float32)
    W_out = W_out.at[d, d].set(1.0 / v_x)
    W_out = W_out.at[d + 1, d + 1].set(1.0 / v_y)

    # TODO(synk): reference initialize_parameters() zeroes W_V, which collapses
    # z_q/y_q to exactly 0; use a deterministic random W_V so the kernel's
    # compute path is actually validated.
    W_V = jax.random.normal(key, (n, n), dtype=jnp.float32) * 0.2
    return W_K, W_Q, W_V, W_out


def reference_forward(E, W_K, W_Q, W_V, W_out, *, d, D):
    """Pure-JAX reference mirroring the PyTorch forward() (unfused)."""
    WOV = W_out @ W_V

    def head(Ein):
        left = jnp.einsum('bki,jk->bij', Ein, W_K)      # E^T @ W_K^T
        right = jnp.einsum('ik,bkj->bij', W_Q, Ein)     # W_Q @ E
        attn = jnp.einsum('bij,bjk->bik', left, right) / float(D)
        EA = jnp.einsum('bnj,bjm->bnm', Ein, attn)
        return jnp.einsum('nk,bkm->bnm', WOV, EA)

    out1 = head(E)
    z = out1[:, d, -1]
    Eu = E.at[:, d, -1].set(z)
    out2 = head(Eu)
    y = out2[:, d + 1, -1]
    return z, y


if __name__ == "__main__":
    # Small shapes consistent with the module: d=8, D=4 -> E_CoT [B, d+2, D+1].
    # Batch = 200 (not 128-aligned) exercises the pad-to-128 path and, after
    # padding to 256, a 2-block grid (both v7x TensorCores active).
    d, D, sigma2 = 8, 4, 0.1
    batch = 200
    n, m = d + 2, D + 1

    key = jax.random.PRNGKey(0)
    k_e, k_v = jax.random.split(key)
    E_CoT = jax.random.normal(k_e, (batch, n, m), dtype=jnp.float32)
    W_K, W_Q, W_V, W_out = make_params(d, sigma2, k_v)

    z_q, y_q = coherent_transformer(E_CoT, W_K, W_Q, W_V, W_out, d=d, D=D)
    z_q, y_q = jax.block_until_ready((z_q, y_q))

    z_ref, y_ref = reference_forward(E_CoT, W_K, W_Q, W_V, W_out, d=d, D=D)

    assert z_q.shape == (batch,) and y_q.shape == (batch,)
    assert jnp.allclose(z_q, z_ref, atol=1e-3, rtol=1e-3)
    assert jnp.allclose(y_q, y_ref, atol=1e-3, rtol=1e-3)
    print("KERNEL_OK")
</pallas_src>

<mosaic_0001>
module attributes {stable_mosaic.version = 11 : i64} {
  func.func @coherent_kernel(%arg0: i32, %arg1: memref<5x10x128xf32, #tpu.memory_space<vmem>>, %arg2: memref<10x10xf32, #tpu.memory_space<vmem>>, %arg3: memref<2x10xf32, #tpu.memory_space<vmem>>, %arg4: memref<2x128xf32, #tpu.memory_space<vmem>>) attributes {dimension_semantics = [#tpu.dimension_semantics<parallel>], iteration_bounds = array<i64: 2>, scalar_prefetch = 0 : i64, scratch_operands = 0 : i64, tpu.core_type = #tpu.core_type<tc>, window_params = [{transform_indices = @transform_0, window_bounds = array<i64: 5, 10, 128>}, {pipeline_mode = #tpu.pipeline_mode<synchronous>, transform_indices = @transform_1, window_bounds = array<i64: 10, 10>}, {pipeline_mode = #tpu.pipeline_mode<synchronous>, transform_indices = @transform_2, window_bounds = array<i64: 2, 10>}, {transform_indices = @transform_3, window_bounds = array<i64: 2, 128>}]} {
    %c0 = arith.constant 0 : index
    %c0_0 = arith.constant 0 : index
    %c0_1 = arith.constant 0 : index
    %0 = vector.load %arg1[%c0, %c0_0, %c0_1] : memref<5x10x128xf32, #tpu.memory_space<vmem>>, vector<5x10x128xf32>
    %c0_2 = arith.constant 0 : index
    %c0_3 = arith.constant 0 : index
    %1 = vector.load %arg2[%c0_2, %c0_3] : memref<10x10xf32, #tpu.memory_space<vmem>>, vector<10x10xf32>
    %c0_4 = arith.constant 0 : index
    %c0_5 = arith.constant 0 : index
    %2 = vector.load %arg3[%c0_4, %c0_5] : memref<2x10xf32, #tpu.memory_space<vmem>>, vector<2x10xf32>
    %3 = vector.extract_strided_slice %0 {offsets = [0, 0, 0], sizes = [4, 10, 128], strides = [1, 1, 1]} : vector<5x10x128xf32> to vector<4x10x128xf32>
    %4 = vector.extract_strided_slice %0 {offsets = [4, 0, 0], sizes = [1, 10, 128], strides = [1, 1, 1]} : vector<5x10x128xf32> to vector<1x10x128xf32>
    %5 = vector.shape_cast %4 : vector<1x10x128xf32> to vector<10x128xf32>
    %cst = arith.constant dense<0.000000e+00> : vector<10x128xf32>
    %6 = tpu.matmul %1, %5, %cst {dimension_numbers = #tpu.dot_dimension_numbers<[1], [0], [0], [1], [0, 0, 1, 1], [], []>} : vector<10x10xf32>, vector<10x128xf32>, vector<10x128xf32> -> vector<10x128xf32>
    %7 = vector.shape_cast %6 : vector<10x128xf32> to vector<1x10x128xf32>
    %8 = vector.broadcast %7 : vector<1x10x128xf32> to vector<4x10x128xf32>
    %9 = arith.mulf %3, %8 : vector<4x10x128xf32>
    %cst_6 = arith.constant dense<0.000000e+00> : vector<4x128xf32>
    %10 = vector.multi_reduction <add>, %9, %cst_6 [1] : vector<4x10x128xf32> to vector<4x128xf32>
    %11 = arith.mulf %5, %6 : vector<10x128xf32>
    %cst_7 = arith.constant dense<0.000000e+00> : vector<128xf32>
    %12 = vector.multi_reduction <add>, %11, %cst_7 [0] : vector<10x128xf32> to vector<128xf32>
    %13 = vector.shape_cast %12 : vector<128xf32> to vector<1x128xf32>
    %14 = vector.shape_cast %10 : vector<4x128xf32> to vector<4x1x128xf32>
    %15 = vector.broadcast %14 : vector<4x1x128xf32> to vector<4x10x128xf32>
    %16 = arith.mulf %3, %15 : vector<4x10x128xf32>
    %cst_8 = arith.constant dense<0.000000e+00> : vector<10x128xf32>
    %17 = vector.multi_reduction <add>, %16, %cst_8 [0] : vector<4x10x128xf32> to vector<10x128xf32>
    %18 = vector.broadcast %13 : vector<1x128xf32> to vector<10x128xf32>
    %19 = arith.mulf %5, %18 : vector<10x128xf32>
    %20 = arith.addf %17, %19 : vector<10x128xf32>
    %21 = vector.extract_strided_slice %2 {offsets = [0, 0], sizes = [1, 10], strides = [1, 1]} : vector<2x10xf32> to vector<1x10xf32>
    %cst_9 = arith.constant dense<0.000000e+00> : vector<1x128xf32>
    %22 = tpu.matmul %21, %20, %cst_9 {dimension_numbers = #tpu.dot_dimension_numbers<[1], [0], [0], [1], [0, 0, 1, 1], [], []>} : vector<1x10xf32>, vector<10x128xf32>, vector<1x128xf32> -> vector<1x128xf32>
    %23 = tpu.iota {dimensions = array<i32: 0>} : vector<10x128xi32>
    %c8_i32 = arith.constant 8 : i32
    %24 = vector.broadcast %c8_i32 : i32 to vector<10x128xi32>
    %25 = arith.cmpi eq, %23, %24 : vector<10x128xi32>
    %26 = vector.shape_cast %22 : vector<1x128xf32> to vector<1x128xf32>
    %27 = vector.broadcast %26 : vector<1x128xf32> to vector<10x128xf32>
    %28 = arith.select %25, %27, %5 : vector<10x128xi1>, vector<10x128xf32>
    %cst_10 = arith.constant dense<0.000000e+00> : vector<10x128xf32>
    %29 = tpu.matmul %1, %28, %cst_10 {dimension_numbers = #tpu.dot_dimension_numbers<[1], [0], [0], [1], [0, 0, 1, 1], [], []>} : vector<10x10xf32>, vector<10x128xf32>, vector<10x128xf32> -> vector<10x128xf32>
    %30 = vector.shape_cast %29 : vector<10x128xf32> to vector<1x10x128xf32>
    %31 = vector.broadcast %30 : vector<1x10x128xf32> to vector<4x10x128xf32>
    %32 = arith.mulf %3, %31 : vector<4x10x128xf32>
    %cst_11 = arith.constant dense<0.000000e+00> : vector<4x128xf32>
    %33 = vector.multi_reduction <add>, %32, %cst_11 [1] : vector<4x10x128xf32> to vector<4x128xf32>
    %34 = arith.mulf %28, %29 : vector<10x128xf32>
    %cst_12 = arith.constant dense<0.000000e+00> : vector<128xf32>
    %35 = vector.multi_reduction <add>, %34, %cst_12 [0] : vector<10x128xf32> to vector<128xf32>
    %36 = vector.shape_cast %35 : vector<128xf32> to vector<1x128xf32>
    %37 = vector.shape_cast %33 : vector<4x128xf32> to vector<4x1x128xf32>
    %38 = vector.broadcast %37 : vector<4x1x128xf32> to vector<4x10x128xf32>
    %39 = arith.mulf %3, %38 : vector<4x10x128xf32>
    %cst_13 = arith.constant dense<0.000000e+00> : vector<10x128xf32>
    %40 = vector.multi_reduction <add>, %39, %cst_13 [0] : vector<4x10x128xf32> to vector<10x128xf32>
    %41 = vector.broadcast %36 : vector<1x128xf32> to vector<10x128xf32>
    %42 = arith.mulf %28, %41 : vector<10x128xf32>
    %43 = arith.addf %40, %42 : vector<10x128xf32>
    %44 = vector.extract_strided_slice %2 {offsets = [1, 0], sizes = [1, 10], strides = [1, 1]} : vector<2x10xf32> to vector<1x10xf32>
    %cst_14 = arith.constant dense<0.000000e+00> : vector<1x128xf32>
    %45 = tpu.matmul %44, %43, %cst_14 {dimension_numbers = #tpu.dot_dimension_numbers<[1], [0], [0], [1], [0, 0, 1, 1], [], []>} : vector<1x10xf32>, vector<10x128xf32>, vector<1x128xf32> -> vector<1x128xf32>
    %46 = tpu.concatenate %22, %45 in 0 : vector<1x128xf32>, vector<1x128xf32> -> vector<2x128xf32>
    %c0_15 = arith.constant 0 : index
    %c0_16 = arith.constant 0 : index
    %47 = vector.load %arg4[%c0_15, %c0_16] : memref<2x128xf32, #tpu.memory_space<vmem>>, vector<2x128xf32>
    tpu.vector_store %arg4[%c0_15, %c0_16], %46 {strides = array<i32>} : memref<2x128xf32, #tpu.memory_space<vmem>>, vector<2x128xf32>,
    return
  }
  func.func @transform_0(%arg0: i32) -> (i32, i32, i32) {
    %c0_i32 = arith.constant 0 : i32
    %c0_i32_0 = arith.constant 0 : i32
    %c0_i32_1 = arith.constant 0 : i32
    return %c0_i32, %c0_i32_0, %arg0 : i32, i32, i32
  }
  func.func @transform_1(%arg0: i32) -> (i32, i32) {
    %c0_i32 = arith.constant 0 : i32
    %c0_i32_0 = arith.constant 0 : i32
    %c0_i32_1 = arith.constant 0 : i32
    return %c0_i32, %c0_i32_0 : i32, i32
  }
  func.func @transform_2(%arg0: i32) -> (i32, i32) {
    %c0_i32 = arith.constant 0 : i32
    %c0_i32_0 = arith.constant 0 : i32
    %c0_i32_1 = arith.constant 0 : i32
    return %c0_i32, %c0_i32_0 : i32, i32
  }
  func.func @transform_3(%arg0: i32) -> (i32, i32) {
    %c0_i32 = arith.constant 0 : i32
    %c0_i32_0 = arith.constant 0 : i32
    return %c0_i32, %arg0 : i32, i32
  }
}

</mosaic_0001>

<llo_original>
// kernel: coherent_transformer.2
$region0: #{coherent_transformer.2}
  #allocation0 [shape = 'u32[]', space=smem, size = 0x4, offset = 0x4, fixed_abs, tag = 'smem constant byte address 0x4 - core index']
  #allocation1 [shape = 'u32[144,128]{1,0:T(1,128)}', space=vmem, size = 0x12000, scoped, tag = 'internal scratch']
  #allocation2 [shape = 'u32[2048]{0}', space=vmem, size = 0x2000, scoped, tag = 'scoped memory for coherent_transformer.2']
  #allocation3 [shape = 'u32[2048]{0}', space=vmem, size = 0x2000, scoped, tag = 'scoped memory for coherent_transformer.2']
  #allocation4 [shape = 'u32[2048]{0}', space=vmem, size = 0x2000, scoped, tag = 'scoped memory for coherent_transformer.2']
  #allocation5 [shape = 'u32[2048]{0}', space=vmem, size = 0x2000, scoped, tag = 'scoped memory for coherent_transformer.2']
  #allocation6 [shape = 'u32[2048]{0}', space=vmem, size = 0x2000, scoped, tag = 'scoped memory for coherent_transformer.2']
  %s0 = inlined_call_operand.vmem [shape: f32[10,10], index: 0, kind: input, shape index: {}]
  %s1 = inlined_call_operand.vmem [shape: f32[2,10], index: 1, kind: input, shape index: {}]
  %s2 = inlined_call_operand.vmem [shape: f32[200,10,5], index: 2, kind: input, shape index: {}]
  %s3 = inlined_call_operand.<no memory space> [shape: f32[], index: 3, kind: input, shape index: {}]
  %s4 = inlined_call_operand.vmem [shape: f32[2,256], index: 4, kind: output, shape index: {}]
  %s5 = sld [smem:[#allocation0]]
  $region45: #{coherent_transformer.2} parent=0
    _
  %s7 = ssub.s32 1, %s5
  %s8 = scalar_select 0, %s7, %s5
  %v9 = vstv %s3
  loop: start=0, step=1, limit=4
  $region2: #{coherent_transformer.2} parent=0 // loop_pre_header
    _
  $region3: #{coherent_transformer.2} parent=0 // loop_header
    %s11 = sphi 0, %s15
    %p12 = scmp.ge.s32.totalorder %s11, 4
    %s21 = sphi 0, %s23
    %s24 = sphi 0, %s21
    %s25 = sphi 0, %s24
    %s41 = sphi 0, %s25
    %s45 = sphi 0, %s45
    %s47 = sphi 0, %s45
    %s48 = sphi 0, %s47
    %s62 = sphi 0, %s48
    %s66 = sphi 0, %s66
    %s68 = sphi 0, %s66
    %s69 = sphi 0, %s68
    %s83 = sphi 0, %s69
    %s89 = sphi 0, %s91
    %s92 = sphi 0, %s89
    %s93 = sphi 0, %s92
    %s109 = sphi 0, %s93
  $region4: #{coherent_transformer.2} parent=0 // loop_header_branch
    %14 = sbr.rel (%p12) target = $region8
  $region5: #{coherent_transformer.2} parent=0 // loop_body
    %s16 = ssub.s32 %s11, 1
    %s17 = ssub.s32 %s11, 2
    %s18 = sadd.s32 %s11, 1
    %s19 = ssub.s32 %s11, %s18
    %p20 = scmp.eq.s32.totalorder %s19, 0
    %s22 = sadd.s32 %s21, 1
    %s23 = scalar_select %p20, %s21, %s22
    %p26 = pneg %p20
    %p27 = scmp.eq.s32.totalorder %s11, 1
    %p28 = por %p26, %p27
    %p29 = scmp.ne.s32.totalorder %s21, %s24
    %p30 = scmp.eq.s32.totalorder %s11, 0
    %p31 = por %p29, %p30
    %p32 = scmp.ne.s32.totalorder %s21, %s24
    %p33 = scmp.eq.s32.totalorder %s16, 1
    %p34 = por %p32, %p33
    %p35 = scmp.ne.s32.totalorder %s24, %s25
    %p36 = scmp.eq.s32.totalorder %s16, 0
    %p37 = por %p35, %p36
    %p38 = scmp.ne.s32.totalorder %s24, %s25
    %p39 = scmp.eq.s32.totalorder %s17, 1
    %p40 = por %p38, %p39
    %p42 = scmp.ne.s32.totalorder %s25, %s41
    %p43 = scmp.eq.s32.totalorder %s17, 0
    %p44 = por %p42, %p43
    %s46 = sadd.s32 %s45, 1
    %p49 = scmp.eq.s32.totalorder %s11, 1
    %p50 = scmp.ne.s32.totalorder %s45, %s47
    %p51 = scmp.eq.s32.totalorder %s11, 0
    %p52 = por %p50, %p51
    %p53 = scmp.ne.s32.totalorder %s45, %s47
    %p54 = scmp.eq.s32.totalorder %s16, 1
    %p55 = por %p53, %p54
    %p56 = scmp.ne.s32.totalorder %s47, %s48
    %p57 = scmp.eq.s32.totalorder %s16, 0
    %p58 = por %p56, %p57
    %p59 = scmp.ne.s32.totalorder %s47, %s48
    %p60 = scmp.eq.s32.totalorder %s17, 1
    %p61 = por %p59, %p60
    %p63 = scmp.ne.s32.totalorder %s48, %s62
    %p64 = scmp.eq.s32.totalorder %s17, 0
    %p65 = por %p63, %p64
    %s67 = sadd.s32 %s66, 1
    %p70 = scmp.eq.s32.totalorder %s11, 1
    %p71 = scmp.ne.s32.totalorder %s66, %s68
    %p72 = scmp.eq.s32.totalorder %s11, 0
    %p73 = por %p71, %p72
    %p74 = scmp.ne.s32.totalorder %s66, %s68
    %p75 = scmp.eq.s32.totalorder %s16, 1
    %p76 = por %p74, %p75
    %p77 = scmp.ne.s32.totalorder %s68, %s69
    %p78 = scmp.eq.s32.totalorder %s16, 0
    %p79 = por %p77, %p78
    %p80 = scmp.ne.s32.totalorder %s68, %s69
    %p81 = scmp.eq.s32.totalorder %s17, 1
    %p82 = por %p80, %p81
    %p84 = scmp.ne.s32.totalorder %s69, %s83
    %p85 = scmp.eq.s32.totalorder %s17, 0
    %p86 = por %p84, %p85
    %s87 = ssub.s32 %s11, %s18
    %p88 = scmp.eq.s32.totalorder %s87, 0
    %s90 = sadd.s32 %s89, 1
    %s91 = scalar_select %p88, %s89, %s90
    %p94 = pneg %p88
    %p95 = scmp.eq.s32.totalorder %s11, 1
    %p96 = por %p94, %p95
    %p97 = scmp.ne.s32.totalorder %s89, %s92
    %p98 = scmp.eq.s32.totalorder %s11, 0
    %p99 = por %p97, %p98
    %p100 = scmp.ne.s32.totalorder %s89, %s92
    %p101 = scmp.eq.s32.totalorder %s16, 1
    %p102 = por %p100, %p101
    %p103 = scmp.ne.s32.totalorder %s92, %s93
    %p104 = scmp.eq.s32.totalorder %s16, 0
    %p105 = por %p103, %p104
    %p106 = scmp.ne.s32.totalorder %s92, %s93
    %p107 = scmp.eq.s32.totalorder %s17, 1
    %p108 = por %p106, %p107
    %p110 = scmp.ne.s32.totalorder %s93, %s109
    %p111 = scmp.eq.s32.totalorder %s17, 0
    %p112 = por %p110, %p111
    %p113 = scmp.le.s32.totalorder 1, %s11
    %p114 = scmp.lt.s32.totalorder %s11, 3
    %p115 = pnand %p113, %p114
    %p116 = pneg %p115
    // Predicated region
    $region9: #{coherent_transformer.2} parent=5 // pred_check
      _
    $region10: #{coherent_transformer.2} parent=5 // pred_check_branch
      %118 = sbr.rel (%p115) target = $region12
    $region11: #{coherent_transformer.2} parent=5 // pred_region
      %s119 = ssub.s32 %s11, 1
      // Predicated region
      $region13: #{coherent_transformer.2} parent=11 // pred_check
        %p120 = pneg %p58
      $region14: #{coherent_transformer.2} parent=11 // pred_check_branch
        %122 = sbr.rel (%p120) target = $region16
      $region15: #{coherent_transformer.2} parent=11 // pred_region
        _
      $region16: #{coherent_transformer.2} parent=11 // pred_fallthru
        _
      // Predicated region
      $region17: #{coherent_transformer.2} parent=11 // pred_check
        %p123 = pneg %p79
      $region18: #{coherent_transformer.2} parent=11 // pred_check_branch
        %125 = sbr.rel (%p123) target = $region20
      $region19: #{coherent_transformer.2} parent=11 // pred_region
        _
      $region20: #{coherent_transformer.2} parent=11 // pred_fallthru
        _
    $region12: #{coherent_transformer.2} parent=5 // pred_fallthru
      _
    %p126 = scmp.lt.s32.totalorder %s11, 2
    // Predicated region
    $region21: #{coherent_transformer.2} parent=5 // pred_check
      %p127 = pneg %p126
    $region22: #{coherent_transformer.2} parent=5 // pred_check_branch
      %129 = sbr.rel (%p127) target = $region24
    $region23: #{coherent_transformer.2} parent=5 // pred_region
      // Predicated region
      $region25: #{coherent_transformer.2} parent=23 // pred_check
        %p130 = pneg %p31
      $region26: #{coherent_transformer.2} parent=23 // pred_check_branch
        %132 = sbr.rel (%p130) target = $region28
      $region27: #{coherent_transformer.2} parent=23 // pred_region
        %s133 = ssub.s32 2, %s11
        %p134 = scmp.lt.s32.totalorder %s133, 1
        %s135 = scalar_select %p134, %s133, 1
        %s136 = smul.u32 1280, %s135
        %p137 = scmp.lt.s32.totalorder %s11, 1
        %s138 = scalar_select %p137, %s11, 1
        %s139 = smul.addr %s138, 8
        %s140 = scalar_lea.vmem %s2, %s139
        %s141 = ssub.s32 2, %s11
        %p142 = scmp.lt.s32.totalorder %s141, 1
        %s143 = scalar_select %p142, %s141, 1
        %s144 = smul.u32 1280, %s143
      $region28: #{coherent_transformer.2} parent=23 // pred_fallthru
        _
    $region24: #{coherent_transformer.2} parent=5 // pred_fallthru
      _
    %p145 = scmp.le.s32.totalorder 1, %s11
    %p146 = scmp.lt.s32.totalorder %s11, 3
    %p147 = pnand %p145, %p146
    %p148 = pneg %p147
    // Predicated region
    $region29: #{coherent_transformer.2} parent=5 // pred_check
      _
    $region30: #{coherent_transformer.2} parent=5 // pred_check_branch
      %150 = sbr.rel (%p147) target = $region32
    $region31: #{coherent_transformer.2} parent=5 // pred_region
      #allocation7 [shape = 'u8[40960]{0}', space=vmem, size = 0xa000, dematerialized = true, scoped, tag = 'FusionAdapter Buffer %fusion.1 = f32[5,10,256]{2,1,0:T(8,128)} fusion(%param_2.3, %param_3), kind=kLoop, calls=%fused_computation.2.clone, metadata={op_name="jit(coherent_transformer)/transpose" stack_frame_id=12}']
      %s151 = ssub.s32 %s11, 1
      %s152 = ssub.s32 2, %s16
      %p153 = scmp.lt.s32.totalorder %s152, 1
      %s154 = scalar_select %p153, %s152, 1
      %s155 = smul.u32 1280, %s154
      %p156 = scmp.lt.s32.totalorder %s16, 1
      %s157 = scalar_select %p156, %s16, 1
      %s158 = smul.addr %s157, 8
      %s159 = scalar_lea.vmem %s2, %s158
      %p160 = pneg %p37
      %p161 = pneg %p34
      %p162 = pneg %p58
      %p163 = pneg %p55
      %p164 = pneg %p79
      %p165 = pneg %p76
      %p166 = pneg %p105
      %p167 = pneg %p102
      %p168 = scmp.lt.s32.totalorder %s16, 1
      %s169 = scalar_select %p168, %s16, 1
      %s170 = smul.addr %s169, 2
      %s171 = scalar_lea.vmem %s4, %s170
      %s172 = ssub.s32 2, %s16
      %p173 = scmp.lt.s32.totalorder %s172, 1
      %s174 = scalar_select %p173, %s172, 1
      %s175 = smul.u32 1280, %s174
      %p176 = scmp.lt.s32.totalorder %s16, 1
      %s177 = scalar_select %p176, %s16, 1
      %s178 = smul.addr %s177, 8
      %s179 = scalar_lea.vmem %s2, %s178
      %s180 = ssub.s32 2, %s16
      %p181 = scmp.lt.s32.totalorder %s180, 1
      %s182 = scalar_select %p181, %s180, 1
      %s183 = smul.u32 1280, %s182
      %p184 = scmp.lt.s32.totalorder %s16, 1
      %s185 = scalar_select %p184, %s16, 1
      %s186 = smul.addr %s185, 2
      %s187 = scalar_lea.vmem %s4, %s186
      %s188 = ssub.s32 1, %s16
      %p189 = scmp.lt.s32.totalorder %s188, 0
      %s190 = scalar_select %p189, 0, 255
      %v191 = vld [vmem:[%s179] sm:%s190]
      %s192 = ssub.s32 1, %s16
      %v193 = vstv %s192
      %vm194 = vcmp.lt.s32.totalorder %v193, 0
      %v195 = vsel %vm194, %v9, %v191
      %v196 = vlaneseq
      %v197 = vshrl.u32 %v196, 7
      %vm199 = vcmp.lt.s32.totalorder %v197, 10
      %v200 = vsel %vm199, %v195, %v9
      %s201 = smul.addr %s16, 128
      %v202 = vlaneseq
      %v203 = vand.u32 %v202, 127
      %v204 = vstv %s201
      %v205 = vadd.s32 %v203, %v204
      %vm206 = vcmp.lt.s32.totalorder %v205, 200
      %v207 = vsel %vm206, %v200, %v9
      %s209 = ssub.s32 256, 1
      %210 = vst [vmem:[#allocation7] sm:%s209] %v207
      %s211 = scalar_lea.vmem %s179, 16
      %s212 = ssub.s32 1, %s16
      %p213 = scmp.lt.s32.totalorder %s212, 0
      %s214 = scalar_select %p213, 0, 255
      %v215 = vld [vmem:[%s211] sm:%s214]
      %s216 = ssub.s32 1, %s16
      %v217 = vstv %s216
      %vm218 = vcmp.lt.s32.totalorder %v217, 0
      %v219 = vsel %vm218, %v9, %v215
      %v220 = vlaneseq
      %v221 = vshrl.u32 %v220, 7
      %v222 = vadd.s32 %v221, 8
      %vm223 = vcmp.lt.s32.totalorder %v222, 10
      %v224 = vsel %vm223, %v219, %v9
      %s225 = smul.addr %s16, 128
      %v226 = vlaneseq
      %v227 = vand.u32 %v226, 127
      %v228 = vstv %s225
      %v229 = vadd.s32 %v227, %v228
      %vm230 = vcmp.lt.s32.totalorder %v229, 200
      %v231 = vsel %vm230, %v224, %v9
      %s232 = scalar_lea.vmem [#allocation7], 8
      %s234 = ssub.s32 256, 1
      %235 = vst [vmem:[%s232] sm:%s234] %v231
      %s236 = scalar_lea.vmem %s179, 32
      %s237 = ssub.s32 1, %s16
      %p238 = scmp.lt.s32.totalorder %s237, 0
      %s239 = scalar_select %p238, 0, 255
      %v240 = vld [vmem:[%s236] sm:%s239]
      %s241 = ssub.s32 1, %s16
      %v242 = vstv %s241
      %vm243 = vcmp.lt.s32.totalorder %v242, 0
      %v244 = vsel %vm243, %v9, %v240
      %v245 = vlaneseq
      %v246 = vshrl.u32 %v245, 7
      %vm248 = vcmp.lt.s32.totalorder %v246, 10
      %v249 = vsel %vm248, %v244, %v9
      %s250 = smul.addr %s16, 128
      %v251 = vlaneseq
      %v252 = vand.u32 %v251, 127
      %v253 = vstv %s250
      %v254 = vadd.s32 %v252, %v253
      %vm255 = vcmp.lt.s32.totalorder %v254, 200
      %v256 = vsel %vm255, %v249, %v9
      %s257 = scalar_lea.vmem [#allocation7], 16
      %s259 = ssub.s32 256, 1
      %260 = vst [vmem:[%s257] sm:%s259] %v256
      %s261 = scalar_lea.vmem %s179, 48
      %s262 = ssub.s32 1, %s16
      %p263 = scmp.lt.s32.totalorder %s262, 0
      %s264 = scalar_select %p263, 0, 255
      %v265 = vld [vmem:[%s261] sm:%s264]
      %s266 = ssub.s32 1, %s16
      %v267 = vstv %s266
      %vm268 = vcmp.lt.s32.totalorder %v267, 0
      %v269 = vsel %vm268, %v9, %v265
      %v270 = vlaneseq
      %v271 = vshrl.u32 %v270, 7
      %v272 = vadd.s32 %v271, 8
      %vm273 = vcmp.lt.s32.totalorder %v272, 10
      %v274 = vsel %vm273, %v269, %v9
      %s275 = smul.addr %s16, 128
      %v276 = vlaneseq
      %v277 = vand.u32 %v276, 127
      %v278 = vstv %s275
      %v279 = vadd.s32 %v277, %v278
      %vm280 = vcmp.lt.s32.totalorder %v279, 200
      %v281 = vsel %vm280, %v274, %v9
      %s282 = scalar_lea.vmem [#allocation7], 24
      %s284 = ssub.s32 256, 1
      %285 = vst [vmem:[%s282] sm:%s284] %v281
      %s286 = scalar_lea.vmem %s179, 64
      %s287 = ssub.s32 1, %s16
      %p288 = scmp.lt.s32.totalorder %s287, 0
      %s289 = scalar_select %p288, 0, 255
      %v290 = vld [vmem:[%s286] sm:%s289]
      %s291 = ssub.s32 1, %s16
      %v292 = vstv %s291
      %vm293 = vcmp.lt.s32.totalorder %v292, 0
      %v294 = vsel %vm293, %v9, %v290
      %v295 = vlaneseq
      %v296 = vshrl.u32 %v295, 7
      %vm298 = vcmp.lt.s32.totalorder %v296, 10
      %v299 = vsel %vm298, %v294, %v9
      %s300 = smul.addr %s16, 128
      %v301 = vlaneseq
      %v302 = vand.u32 %v301, 127
      %v303 = vstv %s300
      %v304 = vadd.s32 %v302, %v303
      %vm305 = vcmp.lt.s32.totalorder %v304, 200
      %v306 = vsel %vm305, %v299, %v9
      %s307 = scalar_lea.vmem [#allocation7], 32
      %s309 = ssub.s32 256, 1
      %310 = vst [vmem:[%s307] sm:%s309] %v306
      %s311 = scalar_lea.vmem %s179, 80
      %s312 = ssub.s32 1, %s16
      %p313 = scmp.lt.s32.totalorder %s312, 0
      %s314 = scalar_select %p313, 0, 255
      %v315 = vld [vmem:[%s311] sm:%s314]
      %s316 = ssub.s32 1, %s16
      %v317 = vstv %s316
      %vm318 = vcmp.lt.s32.totalorder %v317, 0
      %v319 = vsel %vm318, %v9, %v315
      %v320 = vlaneseq
      %v321 = vshrl.u32 %v320, 7
      %v322 = vadd.s32 %v321, 8
      %vm323 = vcmp.lt.s32.totalorder %v322, 10
      %v324 = vsel %vm323, %v319, %v9
      %s325 = smul.addr %s16, 128
      %v326 = vlaneseq
      %v327 = vand.u32 %v326, 127
      %v328 = vstv %s325
      %v329 = vadd.s32 %v327, %v328
      %vm330 = vcmp.lt.s32.totalorder %v329, 200
      %v331 = vsel %vm330, %v324, %v9
      %s332 = scalar_lea.vmem [#allocation7], 40
      %s334 = ssub.s32 256, 1
      %335 = vst [vmem:[%s332] sm:%s334] %v331
      %s336 = scalar_lea.vmem %s179, 96
      %s337 = ssub.s32 1, %s16
      %p338 = scmp.lt.s32.totalorder %s337, 0
      %s339 = scalar_select %p338, 0, 255
      %v340 = vld [vmem:[%s336] sm:%s339]
      %s341 = ssub.s32 1, %s16
      %v342 = vstv %s341
      %vm343 = vcmp.lt.s32.totalorder %v342, 0
      %v344 = vsel %vm343, %v9, %v340
      %v345 = vlaneseq
      %v346 = vshrl.u32 %v345, 7
      %vm348 = vcmp.lt.s32.totalorder %v346, 10
      %v349 = vsel %vm348, %v344, %v9
      %s350 = smul.addr %s16, 128
      %v351 = vlaneseq
      %v352 = vand.u32 %v351, 127
      %v353 = vstv %s350
      %v354 = vadd.s32 %v352, %v353
      %vm355 = vcmp.lt.s32.totalorder %v354, 200
      %v356 = vsel %vm355, %v349, %v9
      %s357 = scalar_lea.vmem [#allocation7], 48
      %s359 = ssub.s32 256, 1
      %360 = vst [vmem:[%s357] sm:%s359] %v356
      %s361 = scalar_lea.vmem %s179, 112
      %s362 = ssub.s32 1, %s16
      %p363 = scmp.lt.s32.totalorder %s362, 0
      %s364 = scalar_select %p363, 0, 255
      %v365 = vld [vmem:[%s361] sm:%s364]
      %s366 = ssub.s32 1, %s16
      %v367 = vstv %s366
      %vm368 = vcmp.lt.s32.totalorder %v367, 0
      %v369 = vsel %vm368, %v9, %v365
      %v370 = vlaneseq
      %v371 = vshrl.u32 %v370, 7
      %v372 = vadd.s32 %v371, 8
      %vm373 = vcmp.lt.s32.totalorder %v372, 10
      %v374 = vsel %vm373, %v369, %v9
      %s375 = smul.addr %s16, 128
      %v376 = vlaneseq
      %v377 = vand.u32 %v376, 127
      %v378 = vstv %s375
      %v379 = vadd.s32 %v377, %v378
      %vm380 = vcmp.lt.s32.totalorder %v379, 200
      %v381 = vsel %vm380, %v374, %v9
      %s382 = scalar_lea.vmem [#allocation7], 56
      %s384 = ssub.s32 256, 1
      %385 = vst [vmem:[%s382] sm:%s384] %v381
      %s386 = scalar_lea.vmem %s179, 128
      %s387 = ssub.s32 1, %s16
      %p388 = scmp.lt.s32.totalorder %s387, 0
      %s389 = scalar_select %p388, 0, 255
      %v390 = vld [vmem:[%s386] sm:%s389]
      %s391 = ssub.s32 1, %s16
      %v392 = vstv %s391
      %vm393 = vcmp.lt.s32.totalorder %v392, 0
      %v394 = vsel %vm393, %v9, %v390
      %v395 = vlaneseq
      %v396 = vshrl.u32 %v395, 7
      %vm398 = vcmp.lt.s32.totalorder %v396, 10
      %v399 = vsel %vm398, %v394, %v9
      %s400 = smul.addr %s16, 128
      %v401 = vlaneseq
      %v402 = vand.u32 %v401, 127
      %v403 = vstv %s400
      %v404 = vadd.s32 %v402, %v403
      %vm405 = vcmp.lt.s32.totalorder %v404, 200
      %v406 = vsel %vm405, %v399, %v9
      %s407 = scalar_lea.vmem [#allocation7], 64
      %s409 = ssub.s32 256, 1
      %410 = vst [vmem:[%s407] sm:%s409] %v406
      %s411 = scalar_lea.vmem %s179, 144
      %s412 = ssub.s32 1, %s16
      %p413 = scmp.lt.s32.totalorder %s412, 0
      %s414 = scalar_select %p413, 0, 255
      %v415 = vld [vmem:[%s411] sm:%s414]
      %s416 = ssub.s32 1, %s16
      %v417 = vstv %s416
      %vm418 = vcmp.lt.s32.totalorder %v417, 0
      %v419 = vsel %vm418, %v9, %v415
      %v420 = vlaneseq
      %v421 = vshrl.u32 %v420, 7
      %v422 = vadd.s32 %v421, 8
      %vm423 = vcmp.lt.s32.totalorder %v422, 10
      %v424 = vsel %vm423, %v419, %v9
      %s425 = smul.addr %s16, 128
      %v426 = vlaneseq
      %v427 = vand.u32 %v426, 127
      %v428 = vstv %s425
      %v429 = vadd.s32 %v427, %v428
      %vm430 = vcmp.lt.s32.totalorder %v429, 200
      %v431 = vsel %vm430, %v424, %v9
      %s432 = scalar_lea.vmem [#allocation7], 72
      %s434 = ssub.s32 256, 1
      %435 = vst [vmem:[%s432] sm:%s434] %v431
      %v436 = vld [vmem:[#allocation7] sm:$0xff]
      %v437 = vld [vmem:[#allocation7 + $0x8] sm:$0x3]
      %v438 = vld [vmem:[#allocation7 + $0x10] sm:$0xff]
      %v439 = vld [vmem:[#allocation7 + $0x18] sm:$0x3]
      %v440 = vld [vmem:[#allocation7 + $0x20] sm:$0xff]
      %v441 = vld [vmem:[#allocation7 + $0x28] sm:$0x3]
      %v442 = vld [vmem:[#allocation7 + $0x30] sm:$0xff]
      %v443 = vld [vmem:[#allocation7 + $0x38] sm:$0x3]
      %v444 = vld [vmem:[#allocation7 + $0x40] sm:$0xff]
      %v445 = vld [vmem:[#allocation7 + $0x48] sm:$0x3]
      %v446 = vld [vmem:[%s0] sm:$0xff]
      %v447 = vld [vmem:[%s0 + $0x8] sm:$0x3]
      %v448 = vld [vmem:[%s1] sm:$0x3]
      %vm449 = vcmask 80896
      %v451 = vsel %vm449, %v446, 0
      %v454 = vsel %vm449, %v447, 0
      %vm456 = vcmask 1041408
      %v458 = vsel %vm456, %v445, 0
      %460 = vmatprep.subr.mxu0 0.0
      %461 = vmatpush1.msra.mxu0 0.0
      %462 = vmatprep.subr.mxu0 0.0
      %463 = vmatpush1.msra.mxu0 0.0
      %464 = vmatprep.subr.mxu0 0.0
      %465 = vmatpush1.msra.mxu0 0.0
      %466 = vmatprep.subr.mxu0 0.0
      %467 = vmatpush1.msra.mxu0 0.0
      %468 = vmatprep.subr.mxu0 0.0
      %469 = vmatpush1.msra.mxu0 0.0
      %470 = vmatprep.subr.mxu0 0.0
      %471 = vmatpush1.msra.mxu0 0.0
      %472 = vmatprep.subr.mxu0 0.0
      %473 = vmatpush1.msra.mxu0 0.0
      %474 = vmatprep.subr.mxu0 0.0
      %475 = vmatpush1.msra.mxu0 0.0
      %476 = vmatprep.subr.mxu0 0.0
      %477 = vmatpush1.msra.mxu0 0.0
      %478 = vmatprep.subr.mxu0 0.0
      %479 = vmatpush1.msra.mxu0 0.0
      %480 = vmatprep.subr.mxu0 0.0
      %481 = vmatpush1.msra.mxu0 0.0
      %482 = vmatprep.subr.mxu0 0.0
      %483 = vmatpush1.msra.mxu0 0.0
      %484 = vmatprep.subr.mxu0 0.0
      %485 = vmatpush1.msra.mxu0 0.0
      %486 = vmatprep.subr.mxu0 0.0
      %487 = vmatpush1.msra.mxu0 0.0
      %488 = vmatprep.subr.mxu0 0.0
      %489 = vmatpush1.msra.mxu0 %v458
      %490 = vmatprep.subr.mxu0 0.0
      %491 = vmatpush1.msra.mxu0 %v444
      %492 = vmatprep.subr.mxu0 0.0
      %493 = vmatpush2.msra.mxu0 0.0
      %494 = vmatprep.subr.mxu0 0.0
      %495 = vmatpush2.msra.mxu0 0.0
      %496 = vmatprep.subr.mxu0 0.0
      %497 = vmatpush2.msra.mxu0 0.0
      %498 = vmatprep.subr.mxu0 0.0
      %499 = vmatpush2.msra.mxu0 0.0
      %500 = vmatprep.subr.mxu0 0.0
      %501 = vmatpush2.msra.mxu0 0.0
      %502 = vmatprep.subr.mxu0 0.0
      %503 = vmatpush2.msra.mxu0 0.0
      %504 = vmatprep.subr.mxu0 0.0
      %505 = vmatpush2.msra.mxu0 0.0
      %506 = vmatprep.subr.mxu0 0.0
      %507 = vmatpush2.msra.mxu0 0.0
      %508 = vmatprep.subr.mxu0 0.0
      %509 = vmatpush2.msra.mxu0 0.0
      %510 = vmatprep.subr.mxu0 0.0
      %511 = vmatpush2.msra.mxu0 0.0
      %512 = vmatprep.subr.mxu0 0.0
      %513 = vmatpush2.msra.mxu0 0.0
      %514 = vmatprep.subr.mxu0 0.0
      %515 = vmatpush2.msra.mxu0 0.0
      %516 = vmatprep.subr.mxu0 0.0
      %517 = vmatpush2.msra.mxu0 0.0
      %518 = vmatprep.subr.mxu0 0.0
      %519 = vmatpush2.msra.mxu0 0.0
      %520 = vmatprep.subr.mxu0 0.0
      %521 = vmatpush2.msra.mxu0 0.0
      %522 = vmatprep.subr.mxu0 0.0
      %523 = vmatpush2.msra.mxu0 0.0
      %524 = vmatprep.mubr.f32.mxu0 0.0
      %525 = vmatmul.mubr.f32.gmra.mxu0 %v451
      %v526 = vpop.f32.mrf.mxu0
      %v527 = vadd.f32 0.0, %v526
      %v528 = vpop.f32.mrf.mxu0
      %529 = vmatprep.mubr.f32.mxu0 0.0
      %530 = vmatmul.mubr.f32.gmra.mxu0 %v454
      %v531 = vpop.f32.mrf.mxu0
      %v532 = vadd.f32 0.0, %v531
      %v533 = vpop.f32.mrf.mxu0
      %534 = vdwg.mxu0
      %v535 = vmul.f32 %v436, %v527
      %v536 = vmul.f32 %v437, %v532
      %v537 = vmul.f32 %v438, %v527
      %v538 = vmul.f32 %v439, %v532
      %v539 = vmul.f32 %v440, %v527
      %v540 = vmul.f32 %v441, %v532
      %v541 = vmul.f32 %v442, %v527
      %v542 = vmul.f32 %v443, %v532
      %v543 = vsel %vm456, %v536, 0.0
      %v544 = vadd.f32 %v535, %v543
      %v545 = vrot.slane %v544, 4
      %v546 = vadd.f32 %v544, %v545
      %v547 = vrot.slane %v546, 2
      %v548 = vadd.f32 %v546, %v547
      %v549 = vrot.slane %v548, 1
      %v550 = vadd.f32 %v548, %v549
      %v551 = vsel %vm456, %v538, 0.0
      %v552 = vadd.f32 %v537, %v551
      %v553 = vrot.slane %v552, 4
      %v554 = vadd.f32 %v552, %v553
      %v555 = vrot.slane %v554, 2
      %v556 = vadd.f32 %v554, %v555
      %v557 = vrot.slane %v556, 1
      %v558 = vadd.f32 %v556, %v557
      %v559 = vsel %vm456, %v540, 0.0
      %v560 = vadd.f32 %v539, %v559
      %v561 = vrot.slane %v560, 4
      %v562 = vadd.f32 %v560, %v561
      %v563 = vrot.slane %v562, 2
      %v564 = vadd.f32 %v562, %v563
      %v565 = vrot.slane %v564, 1
      %v566 = vadd.f32 %v564, %v565
      %v567 = vsel %vm456, %v542, 0.0
      %v568 = vadd.f32 %v541, %v567
      %v569 = vrot.slane %v568, 4
      %v570 = vadd.f32 %v568, %v569
      %v571 = vrot.slane %v570, 2
      %v572 = vadd.f32 %v570, %v571
      %v573 = vrot.slane %v572, 1
      %v574 = vadd.f32 %v572, %v573
      %v575 = vmul.f32 %v444, %v527
      %v576 = vmul.f32 %v445, %v532
      %v577 = vsel %vm456, %v576, 0.0
      %v578 = vadd.f32 %v575, %v577
      %v579 = vrot.slane %v578, 4
      %v580 = vadd.f32 %v578, %v579
      %v581 = vrot.slane %v580, 2
      %v582 = vadd.f32 %v580, %v581
      %v583 = vrot.slane %v582, 1
      %v584 = vadd.f32 %v582, %v583
      %v585 = vmul.f32 %v436, %v550
      %v586 = vmul.f32 %v437, %v550
      %v587 = vmul.f32 %v438, %v558
      %v588 = vmul.f32 %v439, %v558
      %v589 = vmul.f32 %v440, %v566
      %v590 = vmul.f32 %v441, %v566
      %v591 = vmul.f32 %v442, %v574
      %v592 = vmul.f32 %v443, %v574
      %v593 = vadd.f32 %v585, %v587
      %v594 = vadd.f32 %v593, %v589
      %v595 = vadd.f32 %v594, %v591
      %v596 = vsel %vm456, %v586, 0.0
      %v597 = vsel %vm456, %v588, 0.0
      %v598 = vadd.f32 %v596, %v597
      %v599 = vsel %vm456, %v590, 0.0
      %v600 = vadd.f32 %v598, %v599
      %v601 = vsel %vm456, %v592, 0.0
      %v602 = vadd.f32 %v600, %v601
      %v603 = vmul.f32 %v444, %v584
      %v604 = vmul.f32 %v445, %v584
      %v605 = vadd.f32 %v595, %v603
      %v606 = vadd.f32 %v602, %v604
      %v608 = vsel %vm449, %v448, 0
      %v611 = vsel %vm456, %v606, 0
      %613 = vmatprep.subr.mxu0 0.0
      %614 = vmatpush1.msra.mxu0 0.0
      %615 = vmatprep.subr.mxu0 0.0
      %616 = vmatpush1.msra.mxu0 0.0
      %617 = vmatprep.subr.mxu0 0.0
      %618 = vmatpush1.msra.mxu0 0.0
      %619 = vmatprep.subr.mxu0 0.0
      %620 = vmatpush1.msra.mxu0 0.0
      %621 = vmatprep.subr.mxu0 0.0
      %622 = vmatpush1.msra.mxu0 0.0
      %623 = vmatprep.subr.mxu0 0.0
      %624 = vmatpush1.msra.mxu0 0.0
      %625 = vmatprep.subr.mxu0 0.0
      %626 = vmatpush1.msra.mxu0 0.0
      %627 = vmatprep.subr.mxu0 0.0
      %628 = vmatpush1.msra.mxu0 0.0
      %629 = vmatprep.subr.mxu0 0.0
      %630 = vmatpush1.msra.mxu0 0.0
      %631 = vmatprep.subr.mxu0 0.0
      %632 = vmatpush1.msra.mxu0 0.0
      %633 = vmatprep.subr.mxu0 0.0
      %634 = vmatpush1.msra.mxu0 0.0
      %635 = vmatprep.subr.mxu0 0.0
      %636 = vmatpush1.msra.mxu0 0.0
      %637 = vmatprep.subr.mxu0 0.0
      %638 = vmatpush1.msra.mxu0 0.0
      %639 = vmatprep.subr.mxu0 0.0
      %640 = vmatpush1.msra.mxu0 0.0
      %641 = vmatprep.subr.mxu0 0.0
      %642 = vmatpush1.msra.mxu0 %v611
      %643 = vmatprep.subr.mxu0 0.0
      %644 = vmatpush1.msra.mxu0 %v605
      %645 = vmatprep.subr.mxu0 0.0
      %646 = vmatpush2.msra.mxu0 0.0
      %647 = vmatprep.subr.mxu0 0.0
      %648 = vmatpush2.msra.mxu0 0.0
      %649 = vmatprep.subr.mxu0 0.0
      %650 = vmatpush2.msra.mxu0 0.0
      %651 = vmatprep.subr.mxu0 0.0
      %652 = vmatpush2.msra.mxu0 0.0
      %653 = vmatprep.subr.mxu0 0.0
      %654 = vmatpush2.msra.mxu0 0.0
      %655 = vmatprep.subr.mxu0 0.0
      %656 = vmatpush2.msra.mxu0 0.0
      %657 = vmatprep.subr.mxu0 0.0
      %658 = vmatpush2.msra.mxu0 0.0
      %659 = vmatprep.subr.mxu0 0.0
      %660 = vmatpush2.msra.mxu0 0.0
      %661 = vmatprep.subr.mxu0 0.0
      %662 = vmatpush2.msra.mxu0 0.0
      %663 = vmatprep.subr.mxu0 0.0
      %664 = vmatpush2.msra.mxu0 0.0
      %665 = vmatprep.subr.mxu0 0.0
      %666 = vmatpush2.msra.mxu0 0.0
      %667 = vmatprep.subr.mxu0 0.0
      %668 = vmatpush2.msra.mxu0 0.0
      %669 = vmatprep.subr.mxu0 0.0
      %670 = vmatpush2.msra.mxu0 0.0
      %671 = vmatprep.subr.mxu0 0.0
      %672 = vmatpush2.msra.mxu0 0.0
      %673 = vmatprep.subr.mxu0 0.0
      %674 = vmatpush2.msra.mxu0 0.0
      %675 = vmatprep.subr.mxu0 0.0
      %676 = vmatpush2.msra.mxu0 0.0
      %677 = vmatprep.mubr.f32.mxu0 0.0
      %678 = vmatmul.mubr.f32.gmra.mxu0 %v608
      %v679 = vpop.f32.mrf.mxu0
      %v680 = vadd.f32 0.0, %v679
      %v681 = vpop.f32.mrf.mxu0
      %682 = vdwg.mxu0
      %v683 = vlaneseq
      %v684 = vshrl.u32 %v683, 7
      %v685 = vadd.s32 %v684, 8
      %vm686 = vcmp.eq.s32.totalorder %v684, 8
      %vm687 = vcmp.eq.s32.totalorder %v685, 8
      %v688 = vlaneseq
      %v689 = vshrl.u32 %v688, 7
      %v690 = vsub.s32 0, %v689
      %v691 = vrot.slane %v680, %v690
      %v692 = vsel %vm686, %v691, %v444
      %v693 = vsel %vm687, %v691, %v445
      %v695 = vsel %vm456, %v693, 0
      %697 = vmatprep.subr.mxu0 0.0
      %698 = vmatpush1.msra.mxu0 0.0
      %699 = vmatprep.subr.mxu0 0.0
      %700 = vmatpush1.msra.mxu0 0.0
      %701 = vmatprep.subr.mxu0 0.0
      %702 = vmatpush1.msra.mxu0 0.0
      %703 = vmatprep.subr.mxu0 0.0
      %704 = vmatpush1.msra.mxu0 0.0
      %705 = vmatprep.subr.mxu0 0.0
      %706 = vmatpush1.msra.mxu0 0.0
      %707 = vmatprep.subr.mxu0 0.0
      %708 = vmatpush1.msra.mxu0 0.0
      %709 = vmatprep.subr.mxu0 0.0
      %710 = vmatpush1.msra.mxu0 0.0
      %711 = vmatprep.subr.mxu0 0.0
      %712 = vmatpush1.msra.mxu0 0.0
      %713 = vmatprep.subr.mxu0 0.0
      %714 = vmatpush1.msra.mxu0 0.0
      %715 = vmatprep.subr.mxu0 0.0
      %716 = vmatpush1.msra.mxu0 0.0
      %717 = vmatprep.subr.mxu0 0.0
      %718 = vmatpush1.msra.mxu0 0.0
      %719 = vmatprep.subr.mxu0 0.0
      %720 = vmatpush1.msra.mxu0 0.0
      %721 = vmatprep.subr.mxu0 0.0
      %722 = vmatpush1.msra.mxu0 0.0
      %723 = vmatprep.subr.mxu0 0.0
      %724 = vmatpush1.msra.mxu0 0.0
      %725 = vmatprep.subr.mxu0 0.0
      %726 = vmatpush1.msra.mxu0 %v695
      %727 = vmatprep.subr.mxu0 0.0
      %728 = vmatpush1.msra.mxu0 %v692
      %729 = vmatprep.subr.mxu0 0.0
      %730 = vmatpush2.msra.mxu0 0.0
      %731 = vmatprep.subr.mxu0 0.0
      %732 = vmatpush2.msra.mxu0 0.0
      %733 = vmatprep.subr.mxu0 0.0
      %734 = vmatpush2.msra.mxu0 0.0
      %735 = vmatprep.subr.mxu0 0.0
      %736 = vmatpush2.msra.mxu0 0.0
      %737 = vmatprep.subr.mxu0 0.0
      %738 = vmatpush2.msra.mxu0 0.0
      %739 = vmatprep.subr.mxu0 0.0
      %740 = vmatpush2.msra.mxu0 0.0
      %741 = vmatprep.subr.mxu0 0.0
      %742 = vmatpush2.msra.mxu0 0.0
      %743 = vmatprep.subr.mxu0 0.0
      %744 = vmatpush2.msra.mxu0 0.0
      %745 = vmatprep.subr.mxu0 0.0
      %746 = vmatpush2.msra.mxu0 0.0
      %747 = vmatprep.subr.mxu0 0.0
      %748 = vmatpush2.msra.mxu0 0.0
      %749 = vmatprep.subr.mxu0 0.0
      %750 = vmatpush2.msra.mxu0 0.0
      %751 = vmatprep.subr.mxu0 0.0
      %752 = vmatpush2.msra.mxu0 0.0
      %753 = vmatprep.subr.mxu0 0.0
      %754 = vmatpush2.msra.mxu0 0.0
      %755 = vmatprep.subr.mxu0 0.0
      %756 = vmatpush2.msra.mxu0 0.0
      %757 = vmatprep.subr.mxu0 0.0
      %758 = vmatpush2.msra.mxu0 0.0
      %759 = vmatprep.subr.mxu0 0.0
      %760 = vmatpush2.msra.mxu0 0.0
      %761 = vmatprep.mubr.f32.mxu0 0.0
      %762 = vmatmul.mubr.f32.gmra.mxu0 %v451
      %v763 = vpop.f32.mrf.mxu0
      %v764 = vadd.f32 0.0, %v763
      %v765 = vpop.f32.mrf.mxu0
      %766 = vmatprep.mubr.f32.mxu0 0.0
      %767 = vmatmul.mubr.f32.gmra.mxu0 %v454
      %v768 = vpop.f32.mrf.mxu0
      %v769 = vadd.f32 0.0, %v768
      %v770 = vpop.f32.mrf.mxu0
      %771 = vdwg.mxu0
      %v772 = vmul.f32 %v436, %v764
      %v773 = vmul.f32 %v437, %v769
      %v774 = vmul.f32 %v438, %v764
      %v775 = vmul.f32 %v439, %v769
      %v776 = vmul.f32 %v440, %v764
      %v777 = vmul.f32 %v441, %v769
      %v778 = vmul.f32 %v442, %v764
      %v779 = vmul.f32 %v443, %v769
      %v780 = vsel %vm456, %v773, 0.0
      %v781 = vadd.f32 %v772, %v780
      %v782 = vrot.slane %v781, 4
      %v783 = vadd.f32 %v781, %v782
      %v784 = vrot.slane %v783, 2
      %v785 = vadd.f32 %v783, %v784
      %v786 = vrot.slane %v785, 1
      %v787 = vadd.f32 %v785, %v786
      %v788 = vsel %vm456, %v775, 0.0
      %v789 = vadd.f32 %v774, %v788
      %v790 = vrot.slane %v789, 4
      %v791 = vadd.f32 %v789, %v790
      %v792 = vrot.slane %v791, 2
      %v793 = vadd.f32 %v791, %v792
      %v794 = vrot.slane %v793, 1
      %v795 = vadd.f32 %v793, %v794
      %v796 = vsel %vm456, %v777, 0.0
      %v797 = vadd.f32 %v776, %v796
      %v798 = vrot.slane %v797, 4
      %v799 = vadd.f32 %v797, %v798
      %v800 = vrot.slane %v799, 2
      %v801 = vadd.f32 %v799, %v800
      %v802 = vrot.slane %v801, 1
      %v803 = vadd.f32 %v801, %v802
      %v804 = vsel %vm456, %v779, 0.0
      %v805 = vadd.f32 %v778, %v804
      %v806 = vrot.slane %v805, 4
      %v807 = vadd.f32 %v805, %v806
      %v808 = vrot.slane %v807, 2
      %v809 = vadd.f32 %v807, %v808
      %v810 = vrot.slane %v809, 1
      %v811 = vadd.f32 %v809, %v810
      %v812 = vmul.f32 %v692, %v764
      %v813 = vmul.f32 %v693, %v769
      %v814 = vsel %vm456, %v813, 0.0
      %v815 = vadd.f32 %v812, %v814
      %v816 = vrot.slane %v815, 4
      %v817 = vadd.f32 %v815, %v816
      %v818 = vrot.slane %v817, 2
      %v819 = vadd.f32 %v817, %v818
      %v820 = vrot.slane %v819, 1
      %v821 = vadd.f32 %v819, %v820
      %v822 = vmul.f32 %v436, %v787
      %v823 = vmul.f32 %v437, %v787
      %v824 = vmul.f32 %v438, %v795
      %v825 = vmul.f32 %v439, %v795
      %v826 = vmul.f32 %v440, %v803
      %v827 = vmul.f32 %v441, %v803
      %v828 = vmul.f32 %v442, %v811
      %v829 = vmul.f32 %v443, %v811
      %v830 = vadd.f32 %v822, %v824
      %v831 = vadd.f32 %v830, %v826
      %v832 = vadd.f32 %v831, %v828
      %v833 = vsel %vm456, %v823, 0.0
      %v834 = vsel %vm456, %v825, 0.0
      %v835 = vadd.f32 %v833, %v834
      %v836 = vsel %vm456, %v827, 0.0
      %v837 = vadd.f32 %v835, %v836
      %v838 = vsel %vm456, %v829, 0.0
      %v839 = vadd.f32 %v837, %v838
      %v840 = vmul.f32 %v692, %v821
      %v841 = vmul.f32 %v693, %v821
      %v842 = vadd.f32 %v832, %v840
      %v843 = vadd.f32 %v839, %v841
      %v844 = vrot.slane %v448, 1
      %v845 = vsel %vm449, %v844, 0
      %v848 = vsel %vm456, %v843, 0
      %850 = vmatprep.subr.mxu0 0.0
      %851 = vmatpush1.msra.mxu0 0.0
      %852 = vmatprep.subr.mxu0 0.0
      %853 = vmatpush1.msra.mxu0 0.0
      %854 = vmatprep.subr.mxu0 0.0
      %855 = vmatpush1.msra.mxu0 0.0
      %856 = vmatprep.subr.mxu0 0.0
      %857 = vmatpush1.msra.mxu0 0.0
      %858 = vmatprep.subr.mxu0 0.0
      %859 = vmatpush1.msra.mxu0 0.0
      %860 = vmatprep.subr.mxu0 0.0
      %861 = vmatpush1.msra.mxu0 0.0
      %862 = vmatprep.subr.mxu0 0.0
      %863 = vmatpush1.msra.mxu0 0.0
      %864 = vmatprep.subr.mxu0 0.0
      %865 = vmatpush1.msra.mxu0 0.0
      %866 = vmatprep.subr.mxu0 0.0
      %867 = vmatpush1.msra.mxu0 0.0
      %868 = vmatprep.subr.mxu0 0.0
      %869 = vmatpush1.msra.mxu0 0.0
      %870 = vmatprep.subr.mxu0 0.0
      %871 = vmatpush1.msra.mxu0 0.0
      %872 = vmatprep.subr.mxu0 0.0
      %873 = vmatpush1.msra.mxu0 0.0
      %874 = vmatprep.subr.mxu0 0.0
      %875 = vmatpush1.msra.mxu0 0.0
      %876 = vmatprep.subr.mxu0 0.0
      %877 = vmatpush1.msra.mxu0 0.0
      %878 = vmatprep.subr.mxu0 0.0
      %879 = vmatpush1.msra.mxu0 %v848
      %880 = vmatprep.subr.mxu0 0.0
      %881 = vmatpush1.msra.mxu0 %v842
      %882 = vmatprep.subr.mxu0 0.0
      %883 = vmatpush2.msra.mxu0 0.0
      %884 = vmatprep.subr.mxu0 0.0
      %885 = vmatpush2.msra.mxu0 0.0
      %886 = vmatprep.subr.mxu0 0.0
      %887 = vmatpush2.msra.mxu0 0.0
      %888 = vmatprep.subr.mxu0 0.0
      %889 = vmatpush2.msra.mxu0 0.0
      %890 = vmatprep.subr.mxu0 0.0
      %891 = vmatpush2.msra.mxu0 0.0
      %892 = vmatprep.subr.mxu0 0.0
      %893 = vmatpush2.msra.mxu0 0.0
      %894 = vmatprep.subr.mxu0 0.0
      %895 = vmatpush2.msra.mxu0 0.0
      %896 = vmatprep.subr.mxu0 0.0
      %897 = vmatpush2.msra.mxu0 0.0
      %898 = vmatprep.subr.mxu0 0.0
      %899 = vmatpush2.msra.mxu0 0.0
      %900 = vmatprep.subr.mxu0 0.0
      %901 = vmatpush2.msra.mxu0 0.0
      %902 = vmatprep.subr.mxu0 0.0
      %903 = vmatpush2.msra.mxu0 0.0
      %904 = vmatprep.subr.mxu0 0.0
      %905 = vmatpush2.msra.mxu0 0.0
      %906 = vmatprep.subr.mxu0 0.0
      %907 = vmatpush2.msra.mxu0 0.0
      %908 = vmatprep.subr.mxu0 0.0
      %909 = vmatpush2.msra.mxu0 0.0
      %910 = vmatprep.subr.mxu0 0.0
      %911 = vmatpush2.msra.mxu0 0.0
      %912 = vmatprep.subr.mxu0 0.0
      %913 = vmatpush2.msra.mxu0 0.0
      %914 = vmatprep.mubr.f32.mxu0 0.0
      %915 = vmatmul.mubr.f32.gmra.mxu0 %v845
      %v916 = vpop.f32.mrf.mxu0
      %v917 = vadd.f32 0.0, %v916
      %v918 = vpop.f32.mrf.mxu0
      %919 = vdwg.mxu0
      %v921 = vrot.slane %v917, 7
      %vm923 = vcmask 1040384
      %v924 = vsel %vm923, %v680, %v921
      %925 = vst [vmem:[%s187] sm:$0x3] %v924
      %p926 = scmp.lt.s32.totalorder %s16, 1
      %s927 = scalar_select %p926, %s16, 1
      %s928 = smul.addr %s927, 2
      %s929 = scalar_lea.vmem %s4, %s928
      // Predicated region
      $region33: #{coherent_transformer.2} parent=31 // pred_check
        %p930 = pneg %p102
      $region34: #{coherent_transformer.2} parent=31 // pred_check_branch
        %932 = sbr.rel (%p930) target = $region36
      $region35: #{coherent_transformer.2} parent=31 // pred_region
        _
      $region36: #{coherent_transformer.2} parent=31 // pred_fallthru
        _
    $region32: #{coherent_transformer.2} parent=5 // pred_fallthru
      _
    %p933 = scmp.le.s32.totalorder 2, %s11
    // Predicated region
    $region37: #{coherent_transformer.2} parent=5 // pred_check
      %p934 = pneg %p933
    $region38: #{coherent_transformer.2} parent=5 // pred_check_branch
      %936 = sbr.rel (%p934) target = $region40
    $region39: #{coherent_transformer.2} parent=5 // pred_region
      %s937 = ssub.s32 %s11, 2
      // Predicated region
      $region41: #{coherent_transformer.2} parent=39 // pred_check
        %p938 = pneg %p108
      $region42: #{coherent_transformer.2} parent=39 // pred_check_branch
        %940 = sbr.rel (%p938) target = $region44
      $region43: #{coherent_transformer.2} parent=39 // pred_region
        %p941 = scmp.lt.s32.totalorder %s17, 1
        %s942 = scalar_select %p941, %s17, 1
        %s943 = smul.addr %s942, 2
        %s944 = scalar_lea.vmem %s4, %s943
      $region44: #{coherent_transformer.2} parent=39 // pred_fallthru
        _
    $region40: #{coherent_transformer.2} parent=5 // pred_fallthru
      _
  $region6: #{coherent_transformer.2} parent=0 // loop_footer
    %s15 = sadd.s32 1, %s11
  $region7: #{coherent_transformer.2} parent=0 // loop_footer_branch
    %10 = sbr.rel target = $region3
  $region8: #{coherent_transformer.2} parent=0 // loop_exit
    _

</llo_original>
